<compile_context>
chip_gen: v7x
topology: tpu7x:2x2x1
jax: 0.10.0
libtpu: 0.0.40
codegen_flags: <defaults>
</compile_context>

<pallas_src>
import functools
from math import sqrt

import jax
import jax.numpy as jnp
from jax.experimental import pallas as pl
from jax.experimental.pallas import tpu as pltpu


# ----------------------------- small utilities ------------------------------

def _round_up(x, m):
    return (x + m - 1) // m * m


def _pick_tile(n, target):
    """Largest divisor of n that is <= target, preferring multiples of 128
    (lane/MXU dense), then multiples of 8 (sublane). Falls back to n (a block
    equal to the full dim is always legal)."""
    if n <= target:
        return n
    for step in (128, 8):
        t = (target // step) * step
        while t >= step:
            if n % t == 0:
                return t
            t -= step
    return n  # awkward n: single full block (valid, but may be VMEM-heavy)


def _padded_buf_bytes(shape, dtype):
    """VMEM footprint of a buffer, accounting for (8, 128) tile padding."""
    shape = tuple(int(s) for s in shape)
    itemsize = jnp.dtype(dtype).itemsize
    if not shape:
        return itemsize
    lanes = _round_up(shape[-1], 128)
    subl = _round_up(shape[-2], 8) if len(shape) >= 2 else 1
    lead = 1
    for s in shape[:-2]:
        lead *= s
    return lead * subl * lanes * itemsize


def _vmem_limit(buffer_bytes):
    """Scoped-VMEM limit derived from actual buffer sizes (not hard-coded)."""
    need = int(buffer_bytes * 1.25) + (4 << 20)   # margin for compiler temporaries
    limit = max(need, 16 << 20)
    try:
        cap = int(pltpu.get_tpu_info().vmem_capacity_bytes)
        limit = min(limit, cap * 7 // 8)
    except Exception:
        limit = min(limit, 56 << 20)  # safe even on v7x's 64 MiB physical VMEM
    return int(limit)


# --------------------------- pass 1: QKV projection --------------------------

def _qkv_projection_kernel(x_ref, w_ref, q_ref, k_ref, v_ref, *,
                           num_heads, dk, dv, dim_k):
    x = x_ref[0]                                                       # (tn, dim_in)
    # One fused MXU matmul for Q, K and V (f32 accumulation).
    y = jnp.dot(x, w_ref[...], preferred_element_type=jnp.float32)    # (tn, 2*dim_k+dim_v)

    def split_heads(col0, hd):
        # (tn, nh*hd) -> (nh, tn, hd): static lane slices + major-axis concat.
        # Runs once per token block (hoisted out of the attention kv loop).
        return jnp.concatenate(
            [y[None, :, col0 + h * hd: col0 + (h + 1) * hd] for h in range(num_heads)],
            axis=0)

    q_ref[0] = split_heads(0, dk).astype(q_ref.dtype)          # scale already folded in Wq
    k_ref[0] = split_heads(dim_k, dk).astype(k_ref.dtype)
    v_ref[0] = split_heads(2 * dim_k, dv).astype(v_ref.dtype)


# ------------------------ pass 2: flash attention core -----------------------

def _flash_attention_kernel(q_ref, k_ref, v_ref, o_ref, m_scr, l_scr, acc_scr,
                            *, num_heads):
    ki = pl.program_id(2)

    @pl.when(ki == 0)
    def _init():
        m_scr[...] = jnp.full(m_scr.shape, -jnp.inf, dtype=m_scr.dtype)
        l_scr[...] = jnp.zeros(l_scr.shape, dtype=l_scr.dtype)
        acc_scr[...] = jnp.zeros(acc_scr.shape, dtype=acc_scr.dtype)

    q = q_ref[0]                                                       # (nh, tq, dk)
    k = k_ref[0]                                                       # (nh, tk, dk)
    v = v_ref[0]                                                       # (nh, tk, dv)

    # Head-batched QK^T on the MXU (bf16 operands, f32 accumulate).
    s = jnp.einsum('hqd,hkd->hqk', q, k,
                   preferred_element_type=jnp.float32)                 # (nh, tq, tk)

    # Online-softmax update.
    m_prev = m_scr[...]
    m_new = jnp.maximum(m_prev, jnp.max(s, axis=-1, keepdims=True))
    alpha = jnp.exp(m_prev - m_new)
    p = jnp.exp(s - m_new)                                             # (nh, tq, tk)
    l_scr[...] = alpha * l_scr[...] + jnp.sum(p, axis=-1, keepdims=True)
    acc_scr[...] = alpha * acc_scr[...] + jnp.einsum(
        'hqk,hkd->hqd', p.astype(v.dtype), v,
        preferred_element_type=jnp.float32)                            # (nh, tq, dv)
    m_scr[...] = m_new

    @pl.when(ki == pl.num_programs(2) - 1)
    def _finalize():
        # Exact reciprocal: runs once per q-block, negligible cost, best parity.
        out_h = acc_scr[...] * pl.reciprocal(l_scr[...], approx=False)  # (nh, tq, dv)
        # Merge heads once per q-block -> single lane-dense (tq, dim_v) store.
        out = jnp.concatenate([out_h[h] for h in range(num_heads)], axis=-1)
        o_ref[0] = out.astype(o_ref.dtype)


# --------------------------------- wrapper -----------------------------------

def multi_head_self_attention(x, wq, wk, wv, num_heads, *,
                              block_q=256, block_k=256, block_proj=256,
                              compute_dtype=jnp.bfloat16):
    """x: (batch, n, dim_in); wq/wk/wv in nn.Linear layout (out_dim, in_dim), no bias.
    Returns (batch, n, dim_v), matching MultiHeadSelfAttention.forward."""
    batch, n, dim_in = x.shape
    dim_k = wq.shape[0]
    dim_v = wv.shape[0]
    assert dim_k % num_heads == 0 and dim_v % num_heads == 0
    dk = dim_k // num_heads
    dv = dim_v // num_heads
    scale = 1.0 / sqrt(dk)
    out_dtype = x.dtype

    # Host-side weight prep (free constant folding): fold 1/sqrt(dk) into Wq,
    # pre-transpose to (dim_in, out), fuse the three projections into one MXU
    # operand, and cast to the MXU compute dtype.
    w_all = jnp.concatenate([wq * scale, wk, wv], axis=0).T.astype(compute_dtype)
    x_c = x.astype(compute_dtype)

    # ---------------- pass 1: fused QKV projection (once per token) ----------------
    tn = _pick_tile(n, block_proj)
    proj_buf_bytes = (
        2 * _padded_buf_bytes((tn, dim_in), compute_dtype)
        + 2 * _padded_buf_bytes((dim_in, 2 * dim_k + dim_v), compute_dtype)
        + 2 * (2 * _padded_buf_bytes((num_heads, tn, dk), compute_dtype)
               + _padded_buf_bytes((num_heads, tn, dv), compute_dtype))
        + _padded_buf_bytes((tn, 2 * dim_k + dim_v), jnp.float32)
    )

    proj_kernel = functools.partial(
        _qkv_projection_kernel, num_heads=num_heads, dk=dk, dv=dv, dim_k=dim_k)

    q_hm, k_hm, v_hm = pl.pallas_call(
        proj_kernel,
        out_shape=(
            jax.ShapeDtypeStruct((batch, num_heads, n, dk), compute_dtype),
            jax.ShapeDtypeStruct((batch, num_heads, n, dk), compute_dtype),
            jax.ShapeDtypeStruct((batch, num_heads, n, dv), compute_dtype),
        ),
        grid_spec=pltpu.PrefetchScalarGridSpec(
            num_scalar_prefetch=0,
            grid=(batch, n // tn),
            in_specs=[
                pl.BlockSpec((1, tn, dim_in), lambda b, i: (b, i, 0)),
                # Grid-invariant fused weight (block index never changes -> fetched once).
                pl.BlockSpec((dim_in, 2 * dim_k + dim_v), lambda b, i: (0, 0)),
            ],
            out_specs=[
                pl.BlockSpec((1, num_heads, tn, dk), lambda b, i: (b, 0, i, 0)),
                pl.BlockSpec((1, num_heads, tn, dk), lambda b, i: (b, 0, i, 0)),
                pl.BlockSpec((1, num_heads, tn, dv), lambda b, i: (b, 0, i, 0)),
            ],
        ),
        compiler_params=pltpu.CompilerParams(
            dimension_semantics=("parallel", "parallel"),
            vmem_limit_bytes=_vmem_limit(proj_buf_bytes),
        ),
    )(x_c, w_all)

    # ---------------- pass 2: flash attention over head-major Q/K/V ----------------
    tq = _pick_tile(n, block_q)
    tk = _pick_tile(n, block_k)
    grid = (batch, n // tq, n // tk)

    attn_buf_bytes = (
        2 * _padded_buf_bytes((num_heads, tq, dk), compute_dtype)   # Q (double-buffered)
        + 2 * _padded_buf_bytes((num_heads, tk, dk), compute_dtype) # K
        + 2 * _padded_buf_bytes((num_heads, tk, dv), compute_dtype) # V
        + 2 * _padded_buf_bytes((tq, dim_v), out_dtype)             # output
        + 2 * _padded_buf_bytes((num_heads, tq, 1), jnp.float32)    # m, l scratch
        + _padded_buf_bytes((num_heads, tq, dv), jnp.float32)       # acc scratch
        + 2 * _padded_buf_bytes((num_heads, tq, tk), jnp.float32)   # s, p temporaries
    )

    attn_kernel = functools.partial(_flash_attention_kernel, num_heads=num_heads)

    return pl.pallas_call(
        attn_kernel,
        out_shape=jax.ShapeDtypeStruct((batch, n, dim_v), out_dtype),
        grid_spec=pltpu.PrefetchScalarGridSpec(
            num_scalar_prefetch=0,
            grid=grid,
            in_specs=[
                pl.BlockSpec((1, num_heads, tq, dk), lambda b, qi, ki: (b, 0, qi, 0)),
                pl.BlockSpec((1, num_heads, tk, dk), lambda b, qi, ki: (b, 0, ki, 0)),
                pl.BlockSpec((1, num_heads, tk, dv), lambda b, qi, ki: (b, 0, ki, 0)),
            ],
            out_specs=pl.BlockSpec((1, tq, dim_v), lambda b, qi, ki: (b, qi, 0)),
            scratch_shapes=[
                pltpu.VMEM((num_heads, tq, 1), jnp.float32),    # running max m
                pltpu.VMEM((num_heads, tq, 1), jnp.float32),    # running denom l
                pltpu.VMEM((num_heads, tq, dv), jnp.float32),   # output accumulator
            ],
        ),
        compiler_params=pltpu.CompilerParams(
            dimension_semantics=("parallel", "parallel", "arbitrary"),
            vmem_limit_bytes=_vmem_limit(attn_buf_bytes),
        ),
    )(q_hm, k_hm, v_hm)


# -------------------------------- reference ----------------------------------

def _reference(x, wq, wk, wv, num_heads):
    batch, n, dim_in = x.shape
    dim_k, dim_v = wq.shape[0], wv.shape[0]
    dk, dv = dim_k // num_heads, dim_v // num_heads
    q = (x @ wq.T).reshape(batch, n, num_heads, dk).transpose(0, 2, 1, 3)
    k = (x @ wk.T).reshape(batch, n, num_heads, dk).transpose(0, 2, 1, 3)
    v = (x @ wv.T).reshape(batch, n, num_heads, dv).transpose(0, 2, 1, 3)
    dist = jnp.einsum("bhqd,bhkd->bhqk", q, k) / sqrt(dk)
    dist = jax.nn.softmax(dist, axis=-1)
    att = jnp.einsum("bhqk,bhkd->bhqd", dist, v)
    return att.transpose(0, 2, 1, 3).reshape(batch, n, dim_v)


if __name__ == "__main__":
    # Small shapes consistent with the module's forward.
    batch, n = 2, 32
    dim_in, dim_k, dim_v, num_heads = 32, 64, 64, 8

    key = jax.random.PRNGKey(0)
    kx, kq, kk, kv = jax.random.split(key, 4)

    x = jax.random.normal(kx, (batch, n, dim_in), dtype=jnp.float32)
    # nn.Linear layout: (out_dim, in_dim), no bias.
    bound = 1.0 / sqrt(dim_in)
    wq = jax.random.uniform(kq, (dim_k, dim_in), jnp.float32, -bound, bound)
    wk = jax.random.uniform(kk, (dim_k, dim_in), jnp.float32, -bound, bound)
    wv = jax.random.uniform(kv, (dim_v, dim_in), jnp.float32, -bound, bound)

    ref = _reference(x, wq, wk, wv, num_heads)

    # 1) Exactness check: f32 compute, small blocks so the multi-step online-softmax
    #    pipeline (2 q-blocks x 2 kv-blocks per batch) is exercised.
    out_f32 = multi_head_self_attention(
        x, wq, wk, wv, num_heads,
        block_q=16, block_k=16, compute_dtype=jnp.float32)
    out_f32 = jax.block_until_ready(out_f32)
    assert out_f32.shape == (batch, n, dim_v)
    err32 = jnp.max(jnp.abs(out_f32 - ref))
    assert jnp.allclose(out_f32, ref, atol=1e-4, rtol=1e-4), f"f32 max abs err {err32}"

    # 2) Default (perf) path: bf16 MXU operands with f32 accumulation.
    out_bf16 = multi_head_self_attention(x, wq, wk, wv, num_heads)
    out_bf16 = jax.block_until_ready(out_bf16)
    assert out_bf16.shape == (batch, n, dim_v)
    err16 = jnp.max(jnp.abs(out_bf16 - ref))
    assert jnp.allclose(out_bf16, ref, atol=5e-2, rtol=5e-2), f"bf16 max abs err {err16}"

    print("KERNEL_OK")
</pallas_src>

<mosaic_0001>
module attributes {stable_mosaic.version = 11 : i64} {
  func.func @_qkv_projection_kernel(%arg0: i32, %arg1: i32, %arg2: memref<1x32x32xf32, #tpu.memory_space<vmem>>, %arg3: memref<32x192xf32, #tpu.memory_space<vmem>>, %arg4: memref<1x8x32x8xf32, #tpu.memory_space<vmem>>, %arg5: memref<1x8x32x8xf32, #tpu.memory_space<vmem>>, %arg6: memref<1x8x32x8xf32, #tpu.memory_space<vmem>>) attributes {dimension_semantics = [#tpu.dimension_semantics<parallel>, #tpu.dimension_semantics<parallel>], iteration_bounds = array<i64: 2, 1>, scalar_prefetch = 0 : i64, scratch_operands = 0 : i64, tpu.core_type = #tpu.core_type<tc>, window_params = [{transform_indices = @transform_0, window_bounds = array<i64: 1, 32, 32>}, {pipeline_mode = #tpu.pipeline_mode<synchronous>, transform_indices = @transform_1, window_bounds = array<i64: 32, 192>}, {transform_indices = @transform_2, window_bounds = array<i64: 1, 8, 32, 8>}, {transform_indices = @transform_3, window_bounds = array<i64: 1, 8, 32, 8>}, {transform_indices = @transform_4, window_bounds = array<i64: 1, 8, 32, 8>}]} {
    %c0 = arith.constant 0 : index
    %c0_0 = arith.constant 0 : index
    %c0_1 = arith.constant 0 : index
    %0 = vector.load %arg2[%c0, %c0_0, %c0_1] : memref<1x32x32xf32, #tpu.memory_space<vmem>>, vector<1x32x32xf32>
    %1 = vector.shape_cast %0 : vector<1x32x32xf32> to vector<32x32xf32>
    %c0_2 = arith.constant 0 : index
    %c0_3 = arith.constant 0 : index
    %2 = vector.load %arg3[%c0_2, %c0_3] : memref<32x192xf32, #tpu.memory_space<vmem>>, vector<32x192xf32>
    %cst = arith.constant dense<0.000000e+00> : vector<32x192xf32>
    %3 = tpu.matmul %1, %2, %cst {dimension_numbers = #tpu.dot_dimension_numbers<[1], [0], [0], [1], [0, 0, 1, 1], [], []>} : vector<32x32xf32>, vector<32x192xf32>, vector<32x192xf32> -> vector<32x192xf32>
    %4 = vector.extract_strided_slice %3 {offsets = [0, 0], sizes = [32, 8], strides = [1, 1]} : vector<32x192xf32> to vector<32x8xf32>
    %5 = vector.shape_cast %4 : vector<32x8xf32> to vector<1x32x8xf32>
    %6 = vector.extract_strided_slice %3 {offsets = [0, 8], sizes = [32, 8], strides = [1, 1]} : vector<32x192xf32> to vector<32x8xf32>
    %7 = vector.shape_cast %6 : vector<32x8xf32> to vector<1x32x8xf32>
    %8 = vector.extract_strided_slice %3 {offsets = [0, 16], sizes = [32, 8], strides = [1, 1]} : vector<32x192xf32> to vector<32x8xf32>
    %9 = vector.shape_cast %8 : vector<32x8xf32> to vector<1x32x8xf32>
    %10 = vector.extract_strided_slice %3 {offsets = [0, 24], sizes = [32, 8], strides = [1, 1]} : vector<32x192xf32> to vector<32x8xf32>
    %11 = vector.shape_cast %10 : vector<32x8xf32> to vector<1x32x8xf32>
    %12 = vector.extract_strided_slice %3 {offsets = [0, 32], sizes = [32, 8], strides = [1, 1]} : vector<32x192xf32> to vector<32x8xf32>
    %13 = vector.shape_cast %12 : vector<32x8xf32> to vector<1x32x8xf32>
    %14 = vector.extract_strided_slice %3 {offsets = [0, 40], sizes = [32, 8], strides = [1, 1]} : vector<32x192xf32> to vector<32x8xf32>
    %15 = vector.shape_cast %14 : vector<32x8xf32> to vector<1x32x8xf32>
    %16 = vector.extract_strided_slice %3 {offsets = [0, 48], sizes = [32, 8], strides = [1, 1]} : vector<32x192xf32> to vector<32x8xf32>
    %17 = vector.shape_cast %16 : vector<32x8xf32> to vector<1x32x8xf32>
    %18 = vector.extract_strided_slice %3 {offsets = [0, 56], sizes = [32, 8], strides = [1, 1]} : vector<32x192xf32> to vector<32x8xf32>
    %19 = vector.shape_cast %18 : vector<32x8xf32> to vector<1x32x8xf32>
    %20 = tpu.concatenate %5, %7, %9, %11, %13, %15, %17, %19 in 0 : vector<1x32x8xf32>, vector<1x32x8xf32>, vector<1x32x8xf32>, vector<1x32x8xf32>, vector<1x32x8xf32>, vector<1x32x8xf32>, vector<1x32x8xf32>, vector<1x32x8xf32> -> vector<8x32x8xf32>
    %c0_4 = arith.constant 0 : index
    %c0_5 = arith.constant 0 : index
    %c0_6 = arith.constant 0 : index
    %c0_7 = arith.constant 0 : index
    %21 = vector.load %arg4[%c0_4, %c0_5, %c0_6, %c0_7] : memref<1x8x32x8xf32, #tpu.memory_space<vmem>>, vector<1x8x32x8xf32>
    %22 = vector.shape_cast %21 : vector<1x8x32x8xf32> to vector<8x32x8xf32>
    %23 = vector.shape_cast %20 : vector<8x32x8xf32> to vector<1x8x32x8xf32>
    tpu.vector_store %arg4[%c0_4, %c0_5, %c0_6, %c0_7], %23 {strides = array<i32>} : memref<1x8x32x8xf32, #tpu.memory_space<vmem>>, vector<1x8x32x8xf32>,
    %24 = vector.extract_strided_slice %3 {offsets = [0, 64], sizes = [32, 8], strides = [1, 1]} : vector<32x192xf32> to vector<32x8xf32>
    %25 = vector.shape_cast %24 : vector<32x8xf32> to vector<1x32x8xf32>
    %26 = vector.extract_strided_slice %3 {offsets = [0, 72], sizes = [32, 8], strides = [1, 1]} : vector<32x192xf32> to vector<32x8xf32>
    %27 = vector.shape_cast %26 : vector<32x8xf32> to vector<1x32x8xf32>
    %28 = vector.extract_strided_slice %3 {offsets = [0, 80], sizes = [32, 8], strides = [1, 1]} : vector<32x192xf32> to vector<32x8xf32>
    %29 = vector.shape_cast %28 : vector<32x8xf32> to vector<1x32x8xf32>
    %30 = vector.extract_strided_slice %3 {offsets = [0, 88], sizes = [32, 8], strides = [1, 1]} : vector<32x192xf32> to vector<32x8xf32>
    %31 = vector.shape_cast %30 : vector<32x8xf32> to vector<1x32x8xf32>
    %32 = vector.extract_strided_slice %3 {offsets = [0, 96], sizes = [32, 8], strides = [1, 1]} : vector<32x192xf32> to vector<32x8xf32>
    %33 = vector.shape_cast %32 : vector<32x8xf32> to vector<1x32x8xf32>
    %34 = vector.extract_strided_slice %3 {offsets = [0, 104], sizes = [32, 8], strides = [1, 1]} : vector<32x192xf32> to vector<32x8xf32>
    %35 = vector.shape_cast %34 : vector<32x8xf32> to vector<1x32x8xf32>
    %36 = vector.extract_strided_slice %3 {offsets = [0, 112], sizes = [32, 8], strides = [1, 1]} : vector<32x192xf32> to vector<32x8xf32>
    %37 = vector.shape_cast %36 : vector<32x8xf32> to vector<1x32x8xf32>
    %38 = vector.extract_strided_slice %3 {offsets = [0, 120], sizes = [32, 8], strides = [1, 1]} : vector<32x192xf32> to vector<32x8xf32>
    %39 = vector.shape_cast %38 : vector<32x8xf32> to vector<1x32x8xf32>
    %40 = tpu.concatenate %25, %27, %29, %31, %33, %35, %37, %39 in 0 : vector<1x32x8xf32>, vector<1x32x8xf32>, vector<1x32x8xf32>, vector<1x32x8xf32>, vector<1x32x8xf32>, vector<1x32x8xf32>, vector<1x32x8xf32>, vector<1x32x8xf32> -> vector<8x32x8xf32>
    %c0_8 = arith.constant 0 : index
    %c0_9 = arith.constant 0 : index
    %c0_10 = arith.constant 0 : index
    %c0_11 = arith.constant 0 : index
    %41 = vector.load %arg5[%c0_8, %c0_9, %c0_10, %c0_11] : memref<1x8x32x8xf32, #tpu.memory_space<vmem>>, vector<1x8x32x8xf32>
    %42 = vector.shape_cast %41 : vector<1x8x32x8xf32> to vector<8x32x8xf32>
    %43 = vector.shape_cast %40 : vector<8x32x8xf32> to vector<1x8x32x8xf32>
    tpu.vector_store %arg5[%c0_8, %c0_9, %c0_10, %c0_11], %43 {strides = array<i32>} : memref<1x8x32x8xf32, #tpu.memory_space<vmem>>, vector<1x8x32x8xf32>,
    %44 = vector.extract_strided_slice %3 {offsets = [0, 128], sizes = [32, 8], strides = [1, 1]} : vector<32x192xf32> to vector<32x8xf32>
    %45 = vector.shape_cast %44 : vector<32x8xf32> to vector<1x32x8xf32>
    %46 = vector.extract_strided_slice %3 {offsets = [0, 136], sizes = [32, 8], strides = [1, 1]} : vector<32x192xf32> to vector<32x8xf32>
    %47 = vector.shape_cast %46 : vector<32x8xf32> to vector<1x32x8xf32>
    %48 = vector.extract_strided_slice %3 {offsets = [0, 144], sizes = [32, 8], strides = [1, 1]} : vector<32x192xf32> to vector<32x8xf32>
    %49 = vector.shape_cast %48 : vector<32x8xf32> to vector<1x32x8xf32>
    %50 = vector.extract_strided_slice %3 {offsets = [0, 152], sizes = [32, 8], strides = [1, 1]} : vector<32x192xf32> to vector<32x8xf32>
    %51 = vector.shape_cast %50 : vector<32x8xf32> to vector<1x32x8xf32>
    %52 = vector.extract_strided_slice %3 {offsets = [0, 160], sizes = [32, 8], strides = [1, 1]} : vector<32x192xf32> to vector<32x8xf32>
    %53 = vector.shape_cast %52 : vector<32x8xf32> to vector<1x32x8xf32>
    %54 = vector.extract_strided_slice %3 {offsets = [0, 168], sizes = [32, 8], strides = [1, 1]} : vector<32x192xf32> to vector<32x8xf32>
    %55 = vector.shape_cast %54 : vector<32x8xf32> to vector<1x32x8xf32>
    %56 = vector.extract_strided_slice %3 {offsets = [0, 176], sizes = [32, 8], strides = [1, 1]} : vector<32x192xf32> to vector<32x8xf32>
    %57 = vector.shape_cast %56 : vector<32x8xf32> to vector<1x32x8xf32>
    %58 = vector.extract_strided_slice %3 {offsets = [0, 184], sizes = [32, 8], strides = [1, 1]} : vector<32x192xf32> to vector<32x8xf32>
    %59 = vector.shape_cast %58 : vector<32x8xf32> to vector<1x32x8xf32>
    %60 = tpu.concatenate %45, %47, %49, %51, %53, %55, %57, %59 in 0 : vector<1x32x8xf32>, vector<1x32x8xf32>, vector<1x32x8xf32>, vector<1x32x8xf32>, vector<1x32x8xf32>, vector<1x32x8xf32>, vector<1x32x8xf32>, vector<1x32x8xf32> -> vector<8x32x8xf32>
    %c0_12 = arith.constant 0 : index
    %c0_13 = arith.constant 0 : index
    %c0_14 = arith.constant 0 : index
    %c0_15 = arith.constant 0 : index
    %61 = vector.load %arg6[%c0_12, %c0_13, %c0_14, %c0_15] : memref<1x8x32x8xf32, #tpu.memory_space<vmem>>, vector<1x8x32x8xf32>
    %62 = vector.shape_cast %61 : vector<1x8x32x8xf32> to vector<8x32x8xf32>
    %63 = vector.shape_cast %60 : vector<8x32x8xf32> to vector<1x8x32x8xf32>
    tpu.vector_store %arg6[%c0_12, %c0_13, %c0_14, %c0_15], %63 {strides = array<i32>} : memref<1x8x32x8xf32, #tpu.memory_space<vmem>>, vector<1x8x32x8xf32>,
    return
  }
  func.func @transform_0(%arg0: i32, %arg1: i32) -> (i32, i32, i32) {
    %c0_i32 = arith.constant 0 : i32
    %c0_i32_0 = arith.constant 0 : i32
    return %arg0, %arg1, %c0_i32 : i32, i32, i32
  }
  func.func @transform_1(%arg0: i32, %arg1: i32) -> (i32, i32) {
    %c0_i32 = arith.constant 0 : i32
    %c0_i32_0 = arith.constant 0 : i32
    %c0_i32_1 = arith.constant 0 : i32
    return %c0_i32, %c0_i32_0 : i32, i32
  }
  func.func @transform_2(%arg0: i32, %arg1: i32) -> (i32, i32, i32, i32) {
    %c0_i32 = arith.constant 0 : i32
    %c0_i32_0 = arith.constant 0 : i32
    %c0_i32_1 = arith.constant 0 : i32
    return %arg0, %c0_i32, %arg1, %c0_i32_0 : i32, i32, i32, i32
  }
  func.func @transform_3(%arg0: i32, %arg1: i32) -> (i32, i32, i32, i32) {
    %c0_i32 = arith.constant 0 : i32
    %c0_i32_0 = arith.constant 0 : i32
    %c0_i32_1 = arith.constant 0 : i32
    return %arg0, %c0_i32, %arg1, %c0_i32_0 : i32, i32, i32, i32
  }
  func.func @transform_4(%arg0: i32, %arg1: i32) -> (i32, i32, i32, i32) {
    %c0_i32 = arith.constant 0 : i32
    %c0_i32_0 = arith.constant 0 : i32
    %c0_i32_1 = arith.constant 0 : i32
    return %arg0, %c0_i32, %arg1, %c0_i32_0 : i32, i32, i32, i32
  }
}

</mosaic_0001>

<llo_original>
// kernel: tpu_custom_call.1
$region0: #{tpu_custom_call.1}
  #allocation0 [shape = 'u32[]', space=smem, size = 0x4, offset = 0x4, fixed_abs, tag = 'smem constant byte address 0x4 - core index']
  #allocation1 [shape = 'u32[144,128]{1,0:T(1,128)}', space=vmem, size = 0x12000, scoped, tag = 'internal scratch']
  %s0 = inlined_call_operand.hbm [shape: f32[2,32,32], index: 0, kind: input, shape index: {}]
  %s1 = inlined_call_operand.hbm [shape: f32[32,192], index: 1, kind: input, shape index: {}]
  %s2 = inlined_call_operand.vmem [shape: f32[2,8,32,8], index: 2, kind: output, shape index: {0}]
  %s3 = inlined_call_operand.vmem [shape: f32[2,8,32,8], index: 3, kind: output, shape index: {1}]
  %s4 = inlined_call_operand.vmem [shape: f32[2,8,32,8], index: 4, kind: output, shape index: {2}]
  %5 = xla_tuple %s2, %s3, %s4
  %s6 = sld [smem:[#allocation0]]
  $region65: #{tpu_custom_call.1} parent=0
    _
  %s8 = ssub.s32 1, %s6
  %s9 = scalar_select 0, %s8, %s6
  $region1: #{tpu_custom_call.1} parent=0
    #allocation2 [shape = 'u8[32768]{0}', space=vmem, size = 0x8000, scoped, tag = 'input window, operand 0']
    #allocation3 [shape = 's32[2]{0}', space=sflag, size = 0x8, scoped, tag = 'scoped memory for tpu_custom_call.1']
    #allocation4 [shape = 'u8[32768]{0}', space=vmem, size = 0x8000, scoped, tag = 'input window, operand 1, single buffered']
    #allocation5 [shape = 's32[1]{0}', space=sflag, size = 0x4, scoped, tag = 'scoped memory for tpu_custom_call.1']
    %10 = vsyncpa [#allocation3], 0
    %s11 = scalar_lea.sflag [#allocation3], 1
    %12 = vsyncpa %s11, 0
    %13 = vsyncpa [#allocation5], 0
    loop: start=0, step=1, limit=4
    $region2: #{tpu_custom_call.1} parent=1 // loop_pre_header
      _
    $region3: #{tpu_custom_call.1} parent=1 // loop_header
      %s15 = sphi 0, %s19
      %p16 = scmp.ge.s32.totalorder %s15, 4
      %s22 = sphi 0, %s34
      %s23 = sphi 0, %s30
      %s24 = sphi 0, %s22
      %s25 = sphi 0, %s23
      %s26 = sphi 0, %s24
      %s27 = sphi 0, %s25
      %s39 = sphi 0, %s41
      %s42 = sphi 0, %s39
      %s43 = sphi 0, %s42
      %s59 = sphi 0, %s43
      %s63 = sphi 0, %s63
      %s65 = sphi 0, %s63
      %s66 = sphi 0, %s65
      %s80 = sphi 0, %s66
      %s88 = sphi 0, %s90
      %s91 = sphi 0, %s88
      %s92 = sphi 0, %s91
      %s108 = sphi 0, %s92
      %s116 = sphi 0, %s118
      %s119 = sphi 0, %s116
      %s120 = sphi 0, %s119
      %s136 = sphi 0, %s120
      %s144 = sphi 0, %s146
      %s147 = sphi 0, %s144
      %s148 = sphi 0, %s147
      %s164 = sphi 0, %s148
    $region4: #{tpu_custom_call.1} parent=1 // loop_header_branch
      %18 = sbr.rel (%p16) target = $region8
    $region5: #{tpu_custom_call.1} parent=1 // loop_body
      %s20 = ssub.s32 %s15, 1
      %s21 = ssub.s32 %s15, 2
      %s28 = sadd.s32 1, %s23
      %p29 = scmp.ge.s32.totalorder %s28, 1
      %s30 = scalar_select %p29, 0, %s28
      %s31 = sadd.s32 1, %s22
      %s32 = scalar_select %p29, %s31, %s22
      %p33 = scmp.ge.s32.totalorder %s32, 2
      %s34 = scalar_select %p33, 0, %s32
      %s35 = ssub.s32 %s22, %s34
      %s36 = ssub.s32 %s23, %s30
      %s37 = sor.u32 %s35, %s36
      %p38 = scmp.eq.s32.totalorder %s37, 0
      %s40 = sadd.s32 %s39, 1
      %s41 = scalar_select %p38, %s39, %s40
      %p44 = pneg %p38
      %p45 = scmp.eq.s32.totalorder %s15, 1
      %p46 = por %p44, %p45
      %p47 = scmp.ne.s32.totalorder %s39, %s42
      %p48 = scmp.eq.s32.totalorder %s15, 0
      %p49 = por %p47, %p48
      %p50 = scmp.ne.s32.totalorder %s39, %s42
      %p51 = scmp.eq.s32.totalorder %s20, 1
      %p52 = por %p50, %p51
      %p53 = scmp.ne.s32.totalorder %s42, %s43
      %p54 = scmp.eq.s32.totalorder %s20, 0
      %p55 = por %p53, %p54
      %p56 = scmp.ne.s32.totalorder %s42, %s43
      %p57 = scmp.eq.s32.totalorder %s21, 1
      %p58 = por %p56, %p57
      %p60 = scmp.ne.s32.totalorder %s43, %s59
      %p61 = scmp.eq.s32.totalorder %s21, 0
      %p62 = por %p60, %p61
      %s64 = sadd.s32 %s63, 1
      %p67 = scmp.eq.s32.totalorder %s15, 1
      %p68 = scmp.ne.s32.totalorder %s63, %s65
      %p69 = scmp.eq.s32.totalorder %s15, 0
      %p70 = por %p68, %p69
      %p71 = scmp.ne.s32.totalorder %s63, %s65
      %p72 = scmp.eq.s32.totalorder %s20, 1
      %p73 = por %p71, %p72
      %p74 = scmp.ne.s32.totalorder %s65, %s66
      %p75 = scmp.eq.s32.totalorder %s20, 0
      %p76 = por %p74, %p75
      %p77 = scmp.ne.s32.totalorder %s65, %s66
      %p78 = scmp.eq.s32.totalorder %s21, 1
      %p79 = por %p77, %p78
      %p81 = scmp.ne.s32.totalorder %s66, %s80
      %p82 = scmp.eq.s32.totalorder %s21, 0
      %p83 = por %p81, %p82
      %s84 = ssub.s32 %s22, %s34
      %s85 = ssub.s32 %s23, %s30
      %s86 = sor.u32 %s84, %s85
      %p87 = scmp.eq.s32.totalorder %s86, 0
      %s89 = sadd.s32 %s88, 1
      %s90 = scalar_select %p87, %s88, %s89
      %p93 = pneg %p87
      %p94 = scmp.eq.s32.totalorder %s15, 1
      %p95 = por %p93, %p94
      %p96 = scmp.ne.s32.totalorder %s88, %s91
      %p97 = scmp.eq.s32.totalorder %s15, 0
      %p98 = por %p96, %p97
      %p99 = scmp.ne.s32.totalorder %s88, %s91
      %p100 = scmp.eq.s32.totalorder %s20, 1
      %p101 = por %p99, %p100
      %p102 = scmp.ne.s32.totalorder %s91, %s92
      %p103 = scmp.eq.s32.totalorder %s20, 0
      %p104 = por %p102, %p103
      %p105 = scmp.ne.s32.totalorder %s91, %s92
      %p106 = scmp.eq.s32.totalorder %s21, 1
      %p107 = por %p105, %p106
      %p109 = scmp.ne.s32.totalorder %s92, %s108
      %p110 = scmp.eq.s32.totalorder %s21, 0
      %p111 = por %p109, %p110
      %s112 = ssub.s32 %s22, %s34
      %s113 = ssub.s32 %s23, %s30
      %s114 = sor.u32 %s112, %s113
      %p115 = scmp.eq.s32.totalorder %s114, 0
      %s117 = sadd.s32 %s116, 1
      %s118 = scalar_select %p115, %s116, %s117
      %p121 = pneg %p115
      %p122 = scmp.eq.s32.totalorder %s15, 1
      %p123 = por %p121, %p122
      %p124 = scmp.ne.s32.totalorder %s116, %s119
      %p125 = scmp.eq.s32.totalorder %s15, 0
      %p126 = por %p124, %p125
      %p127 = scmp.ne.s32.totalorder %s116, %s119
      %p128 = scmp.eq.s32.totalorder %s20, 1
      %p129 = por %p127, %p128
      %p130 = scmp.ne.s32.totalorder %s119, %s120
      %p131 = scmp.eq.s32.totalorder %s20, 0
      %p132 = por %p130, %p131
      %p133 = scmp.ne.s32.totalorder %s119, %s120
      %p134 = scmp.eq.s32.totalorder %s21, 1
      %p135 = por %p133, %p134
      %p137 = scmp.ne.s32.totalorder %s120, %s136
      %p138 = scmp.eq.s32.totalorder %s21, 0
      %p139 = por %p137, %p138
      %s140 = ssub.s32 %s22, %s34
      %s141 = ssub.s32 %s23, %s30
      %s142 = sor.u32 %s140, %s141
      %p143 = scmp.eq.s32.totalorder %s142, 0
      %s145 = sadd.s32 %s144, 1
      %s146 = scalar_select %p143, %s144, %s145
      %p149 = pneg %p143
      %p150 = scmp.eq.s32.totalorder %s15, 1
      %p151 = por %p149, %p150
      %p152 = scmp.ne.s32.totalorder %s144, %s147
      %p153 = scmp.eq.s32.totalorder %s15, 0
      %p154 = por %p152, %p153
      %p155 = scmp.ne.s32.totalorder %s144, %s147
      %p156 = scmp.eq.s32.totalorder %s20, 1
      %p157 = por %p155, %p156
      %p158 = scmp.ne.s32.totalorder %s147, %s148
      %p159 = scmp.eq.s32.totalorder %s20, 0
      %p160 = por %p158, %p159
      %p161 = scmp.ne.s32.totalorder %s147, %s148
      %p162 = scmp.eq.s32.totalorder %s21, 1
      %p163 = por %p161, %p162
      %p165 = scmp.ne.s32.totalorder %s148, %s164
      %p166 = scmp.eq.s32.totalorder %s21, 0
      %p167 = por %p165, %p166
      %p168 = scmp.le.s32.totalorder 1, %s15
      %p169 = scmp.lt.s32.totalorder %s15, 3
      %p170 = pnand %p168, %p169
      %p171 = pneg %p170
      // Predicated region
      $region9: #{tpu_custom_call.1} parent=5 // pred_check
        _
      $region10: #{tpu_custom_call.1} parent=5 // pred_check_branch
        %173 = sbr.rel (%p170) target = $region12
      $region11: #{tpu_custom_call.1} parent=5 // pred_region
        %s174 = ssub.s32 %s15, 1
        // Predicated region
        $region13: #{tpu_custom_call.1} parent=11 // pred_check
          %p175 = pneg %p76
        $region14: #{tpu_custom_call.1} parent=11 // pred_check_branch
          %177 = sbr.rel (%p175) target = $region16
        $region15: #{tpu_custom_call.1} parent=11 // pred_region
          %s179 = ssub.s32 1024, 1024
          %180 = vsyncadd [#allocation5], %s179
          %s181 = sshll.u32 [#allocation4], 4
          %s182 = int_to_ptr.vmem [resolvable:$true] %s181
          %187 = dma.hbm_to_vmem [thread:$0]  %s1, 1024, %s182, [#allocation5], 256, 256, 16
        $region16: #{tpu_custom_call.1} parent=11 // pred_fallthru
          _
      $region12: #{tpu_custom_call.1} parent=5 // pred_fallthru
        _
      %p188 = scmp.lt.s32.totalorder %s15, 2
      // Predicated region
      $region17: #{tpu_custom_call.1} parent=5 // pred_check
        %p189 = pneg %p188
      $region18: #{tpu_custom_call.1} parent=5 // pred_check_branch
        %191 = sbr.rel (%p189) target = $region20
      $region19: #{tpu_custom_call.1} parent=5 // pred_region
        // Predicated region
        $region21: #{tpu_custom_call.1} parent=19 // pred_check
          %p192 = pneg %p49
        $region22: #{tpu_custom_call.1} parent=19 // pred_check_branch
          %194 = sbr.rel (%p192) target = $region24
        $region23: #{tpu_custom_call.1} parent=19 // pred_region
          %s195 = sand.u32 %s39, 1
          %s196 = scalar_lea.sflag [#allocation3], %s195
          %s197 = sand.u32 %s39, 1
          %s198 = smul.addr %s197, 32
          %s199 = scalar_lea.vmem [#allocation2], %s198
          %s200 = smul.u32 4, %s23
          %s202 = ssub.s32 512, 512
          %203 = vsyncadd %s196, %s202
          %s204 = smul.addr %s22, 4
          %s205 = sadd.s32 %s200, %s204
          %s206 = smul.addr %s205, 128
          %s207 = scalar_lea.hbm %s0, %s206
          %s208 = sshll.u32 %s199, 4
          %s209 = int_to_ptr.vmem [resolvable:$true] %s208
          %214 = dma.hbm_to_vmem [thread:$0]  %s207, 512, %s209, %s196, 128, 128, 8
        $region24: #{tpu_custom_call.1} parent=19 // pred_fallthru
          _
      $region20: #{tpu_custom_call.1} parent=5 // pred_fallthru
        _
      %p215 = scmp.le.s32.totalorder 1, %s15
      %p216 = scmp.lt.s32.totalorder %s15, 3
      %p217 = pnand %p215, %p216
      %p218 = pneg %p217
      // Predicated region
      $region25: #{tpu_custom_call.1} parent=5 // pred_check
        _
      $region26: #{tpu_custom_call.1} parent=5 // pred_check_branch
        %220 = sbr.rel (%p217) target = $region28
      $region27: #{tpu_custom_call.1} parent=5 // pred_region
        %s221 = ssub.s32 %s15, 1
        %s222 = sand.u32 %s42, 1
        %s223 = scalar_lea.sflag [#allocation3], %s222
        %s224 = sand.u32 %s42, 1
        %s225 = smul.addr %s224, 32
        %s226 = scalar_lea.vmem [#allocation2], %s225
        // Predicated region
        $region29: #{tpu_custom_call.1} parent=27 // pred_check
          %p227 = pneg %p55
        $region30: #{tpu_custom_call.1} parent=27 // pred_check_branch
          %229 = sbr.rel (%p227) target = $region32
        $region31: #{tpu_custom_call.1} parent=27 // pred_region
          %230 = dma.done %s223, 512
        $region32: #{tpu_custom_call.1} parent=27 // pred_fallthru
          _
        // Predicated region
        $region33: #{tpu_custom_call.1} parent=27 // pred_check
          %p231 = pneg %p76
        $region34: #{tpu_custom_call.1} parent=27 // pred_check_branch
          %233 = sbr.rel (%p231) target = $region36
        $region35: #{tpu_custom_call.1} parent=27 // pred_region
          %234 = dma.done [#allocation5], 1024
        $region36: #{tpu_custom_call.1} parent=27 // pred_fallthru
          _
        %s235 = sand.u32 %s42, 1
        %s236 = scalar_lea.sflag [#allocation3], %s235
        %s237 = sand.u32 %s42, 1
        %s238 = smul.addr %s237, 32
        %s239 = scalar_lea.vmem [#allocation2], %s238
        %p240 = pneg %p55
        %p241 = pneg %p52
        %p242 = pneg %p76
        %p243 = pneg %p73
        %p244 = pneg %p104
        %p245 = pneg %p101
        %s246 = smul.u32 4, %s25
        %p247 = scmp.lt.s32.totalorder %s24, 1
        %s248 = scalar_select %p247, %s24, 1
        %p249 = scmp.lt.s32.totalorder %s246, 3
        %s250 = scalar_select %p249, %s246, 3
        %s251 = smul.addr %s248, 32
        %s252 = sadd.s32 %s250, %s251
        %s253 = smul.addr %s252, 8
        %s254 = scalar_lea.vmem %s2, %s253
        %p255 = pneg %p132
        %p256 = pneg %p129
        %s257 = smul.u32 4, %s25
        %p258 = scmp.lt.s32.totalorder %s24, 1
        %s259 = scalar_select %p258, %s24, 1
        %p260 = scmp.lt.s32.totalorder %s257, 3
        %s261 = scalar_select %p260, %s257, 3
        %s262 = smul.addr %s259, 32
        %s263 = sadd.s32 %s261, %s262
        %s264 = smul.addr %s263, 8
        %s265 = scalar_lea.vmem %s3, %s264
        %p266 = pneg %p160
        %p267 = pneg %p157
        %s268 = smul.u32 4, %s25
        %p269 = scmp.lt.s32.totalorder %s24, 1
        %s270 = scalar_select %p269, %s24, 1
        %p271 = scmp.lt.s32.totalorder %s268, 3
        %s272 = scalar_select %p271, %s268, 3
        %s273 = smul.addr %s270, 32
        %s274 = sadd.s32 %s272, %s273
        %s275 = smul.addr %s274, 8
        %s276 = scalar_lea.vmem %s4, %s275
        %s277 = smul.u32 4, %s25
        %s278 = smul.u32 4, %s25
        %p279 = scmp.lt.s32.totalorder %s24, 1
        %s280 = scalar_select %p279, %s24, 1
        %p281 = scmp.lt.s32.totalorder %s278, 3
        %s282 = scalar_select %p281, %s278, 3
        %s283 = smul.addr %s280, 32
        %s284 = sadd.s32 %s282, %s283
        %s285 = smul.addr %s284, 8
        %s286 = scalar_lea.vmem %s2, %s285
        %s287 = smul.u32 4, %s25
        %s288 = smul.u32 4, %s25
        %p289 = scmp.lt.s32.totalorder %s24, 1
        %s290 = scalar_select %p289, %s24, 1
        %p291 = scmp.lt.s32.totalorder %s288, 3
        %s292 = scalar_select %p291, %s288, 3
        %s293 = smul.addr %s290, 32
        %s294 = sadd.s32 %s292, %s293
        %s295 = smul.addr %s294, 8
        %s296 = scalar_lea.vmem %s3, %s295
        %s297 = smul.u32 4, %s25
        %s298 = smul.u32 4, %s25
        %p299 = scmp.lt.s32.totalorder %s24, 1
        %s300 = scalar_select %p299, %s24, 1
        %p301 = scmp.lt.s32.totalorder %s298, 3
        %s302 = scalar_select %p301, %s298, 3
        %s303 = smul.addr %s300, 32
        %s304 = sadd.s32 %s302, %s303
        %s305 = smul.addr %s304, 8
        %s306 = scalar_lea.vmem %s4, %s305
        %s307 = smul.u32 4, %s25
        %v308 = vld [vmem:[%s226] sm:$0xff]
        %v309 = vld [vmem:[%s226 + $0x8] sm:$0xff]
        %v310 = vld [vmem:[%s226 + $0x10] sm:$0xff]
        %v311 = vld [vmem:[%s226 + $0x18] sm:$0xff]
        %v312 = vld [vmem:[#allocation4] sm:$0xff]
        %v313 = vld [vmem:[#allocation4 + $0x8] sm:$0xff]
        %v314 = vld [vmem:[#allocation4 + $0x10] sm:$0xff]
        %v315 = vld [vmem:[#allocation4 + $0x18] sm:$0xff]
        %v316 = vld [vmem:[#allocation4 + $0x20] sm:$0xff]
        %v317 = vld [vmem:[#allocation4 + $0x28] sm:$0xff]
        %v318 = vld [vmem:[#allocation4 + $0x30] sm:$0xff]
        %v319 = vld [vmem:[#allocation4 + $0x38] sm:$0xff]
        %vm320 = vcmask 261120
        %v322 = vsel %vm320, %v308, 0
        %v325 = vsel %vm320, %v309, 0
        %v328 = vsel %vm320, %v310, 0
        %v331 = vsel %vm320, %v311, 0
        %333 = vmatprep.subr.mxu0 %v313
        %334 = vmatpush1.msra.mxu0 %v312
        %335 = vmatprep.subr.mxu0 %v315
        %336 = vmatpush1.msra.mxu0 %v314
        %337 = vmatprep.subr.mxu0 %v317
        %338 = vmatpush1.msra.mxu0 %v316
        %339 = vmatprep.subr.mxu0 %v319
        %340 = vmatpush1.msra.mxu0 %v318
        %341 = vmatprep.subr.mxu0 0.0
        %342 = vmatpush1.msra.mxu0 0.0
        %343 = vmatprep.subr.mxu0 0.0
        %344 = vmatpush1.msra.mxu0 0.0
        %345 = vmatprep.subr.mxu0 0.0
        %346 = vmatpush1.msra.mxu0 0.0
        %347 = vmatprep.subr.mxu0 0.0
        %348 = vmatpush1.msra.mxu0 0.0
        %349 = vmatprep.subr.mxu0 0.0
        %350 = vmatpush1.msra.mxu0 0.0
        %351 = vmatprep.subr.mxu0 0.0
        %352 = vmatpush1.msra.mxu0 0.0
        %353 = vmatprep.subr.mxu0 0.0
        %354 = vmatpush1.msra.mxu0 0.0
        %355 = vmatprep.subr.mxu0 0.0
        %356 = vmatpush1.msra.mxu0 0.0
        %357 = vmatprep.subr.mxu0 0.0
        %358 = vmatpush1.msra.mxu0 0.0
        %359 = vmatprep.subr.mxu0 0.0
        %360 = vmatpush1.msra.mxu0 0.0
        %361 = vmatprep.subr.mxu0 0.0
        %362 = vmatpush1.msra.mxu0 0.0
        %363 = vmatprep.subr.mxu0 0.0
        %364 = vmatpush1.msra.mxu0 0.0
        %365 = vmatprep.subr.mxu0 0.0
        %366 = vmatpush1.msra.mxu0 0.0
        %367 = vmatprep.subr.mxu0 0.0
        %368 = vmatpush1.msra.mxu0 0.0
        %369 = vmatprep.subr.mxu0 0.0
        %370 = vmatpush1.msra.mxu0 0.0
        %371 = vmatprep.subr.mxu0 0.0
        %372 = vmatpush1.msra.mxu0 0.0
        %373 = vmatprep.subr.mxu0 0.0
        %374 = vmatpush1.msra.mxu0 0.0
        %375 = vmatprep.subr.mxu0 0.0
        %376 = vmatpush1.msra.mxu0 0.0
        %377 = vmatprep.subr.mxu0 0.0
        %378 = vmatpush1.msra.mxu0 0.0
        %379 = vmatprep.subr.mxu0 0.0
        %380 = vmatpush1.msra.mxu0 0.0
        %381 = vmatprep.subr.mxu0 0.0
        %382 = vmatpush1.msra.mxu0 0.0
        %383 = vmatprep.subr.mxu0 0.0
        %384 = vmatpush1.msra.mxu0 0.0
        %385 = vmatprep.subr.mxu0 0.0
        %386 = vmatpush1.msra.mxu0 0.0
        %387 = vmatprep.subr.mxu0 0.0
        %388 = vmatpush1.msra.mxu0 0.0
        %389 = vmatprep.subr.mxu0 0.0
        %390 = vmatpush1.msra.mxu0 0.0
        %391 = vmatprep.subr.mxu0 0.0
        %392 = vmatpush1.msra.mxu0 0.0
        %393 = vmatprep.subr.mxu0 0.0
        %394 = vmatpush1.msra.mxu0 0.0
        %395 = vmatprep.subr.mxu0 0.0
        %396 = vmatpush1.msra.mxu0 0.0
        %397 = vmatprep.mubr.f32.mxu0 0.0
        %398 = vmatmul.mubr.f32.gmra.mrb[0].mxu0 %v322
        %v399 = vpop.f32.mrb[0].mxu0
        %v400 = vadd.f32 0.0, %v399
        %v401 = vpop.f32.mrb[0].mxu0
        %v402 = vadd.f32 0.0, %v401
        %403 = vmatprep.mubr.f32.mxu0 0.0
        %404 = vmatmul.mubr.f32.gmra.mrb[0].mxu0 %v325
        %v405 = vpop.f32.mrb[0].mxu0
        %v406 = vadd.f32 0.0, %v405
        %v407 = vpop.f32.mrb[0].mxu0
        %v408 = vadd.f32 0.0, %v407
        %409 = vmatprep.mubr.f32.mxu0 0.0
        %410 = vmatmul.mubr.f32.gmra.mrb[0].mxu0 %v328
        %v411 = vpop.f32.mrb[0].mxu0
        %v412 = vadd.f32 0.0, %v411
        %v413 = vpop.f32.mrb[0].mxu0
        %v414 = vadd.f32 0.0, %v413
        %415 = vmatprep.mubr.f32.mxu0 0.0
        %416 = vmatmul.mubr.f32.gmra.mrb[0].mxu0 %v331
        %v417 = vpop.f32.mrb[0].mxu0
        %v418 = vadd.f32 0.0, %v417
        %v419 = vpop.f32.mrb[0].mxu0
        %v420 = vadd.f32 0.0, %v419
        %421 = vdwg.mxu0
        %426 = vrot.lane.b32.xlu0 %v400, 120
        %v427 = vpop.permute.xlu0 %426
        %428 = vrot.lane.b32.xlu0 %v406, 120
        %v429 = vpop.permute.xlu0 %428
        %430 = vrot.lane.b32.xlu0 %v412, 120
        %v431 = vpop.permute.xlu0 %430
        %432 = vrot.lane.b32.xlu0 %v418, 120
        %v433 = vpop.permute.xlu0 %432
        %438 = vrot.lane.b32.xlu0 %v400, 112
        %v439 = vpop.permute.xlu0 %438
        %440 = vrot.lane.b32.xlu0 %v406, 112
        %v441 = vpop.permute.xlu0 %440
        %442 = vrot.lane.b32.xlu0 %v412, 112
        %v443 = vpop.permute.xlu0 %442
        %444 = vrot.lane.b32.xlu0 %v418, 112
        %v445 = vpop.permute.xlu0 %444
        %450 = vrot.lane.b32.xlu0 %v400, 104
        %v451 = vpop.permute.xlu0 %450
        %452 = vrot.lane.b32.xlu0 %v406, 104
        %v453 = vpop.permute.xlu0 %452
        %454 = vrot.lane.b32.xlu0 %v412, 104
        %v455 = vpop.permute.xlu0 %454
        %456 = vrot.lane.b32.xlu0 %v418, 104
        %v457 = vpop.permute.xlu0 %456
        %462 = vrot.lane.b32.xlu0 %v400, 96
        %v463 = vpop.permute.xlu0 %462
        %464 = vrot.lane.b32.xlu0 %v406, 96
        %v465 = vpop.permute.xlu0 %464
        %466 = vrot.lane.b32.xlu0 %v412, 96
        %v467 = vpop.permute.xlu0 %466
        %468 = vrot.lane.b32.xlu0 %v418, 96
        %v469 = vpop.permute.xlu0 %468
        %474 = vrot.lane.b32.xlu0 %v400, 88
        %v475 = vpop.permute.xlu0 %474
        %476 = vrot.lane.b32.xlu0 %v406, 88
        %v477 = vpop.permute.xlu0 %476
        %478 = vrot.lane.b32.xlu0 %v412, 88
        %v479 = vpop.permute.xlu0 %478
        %480 = vrot.lane.b32.xlu0 %v418, 88
        %v481 = vpop.permute.xlu0 %480
        %486 = vrot.lane.b32.xlu0 %v400, 80
        %v487 = vpop.permute.xlu0 %486
        %488 = vrot.lane.b32.xlu0 %v406, 80
        %v489 = vpop.permute.xlu0 %488
        %490 = vrot.lane.b32.xlu0 %v412, 80
        %v491 = vpop.permute.xlu0 %490
        %492 = vrot.lane.b32.xlu0 %v418, 80
        %v493 = vpop.permute.xlu0 %492
        %498 = vrot.lane.b32.xlu0 %v400, 72
        %v499 = vpop.permute.xlu0 %498
        %500 = vrot.lane.b32.xlu0 %v406, 72
        %v501 = vpop.permute.xlu0 %500
        %502 = vrot.lane.b32.xlu0 %v412, 72
        %v503 = vpop.permute.xlu0 %502
        %504 = vrot.lane.b32.xlu0 %v418, 72
        %v505 = vpop.permute.xlu0 %504
        %vm510 = vcmask 64512
        %511 = vst.msk [vmem:[%s286] sm:$0xff] %vm510, %v400
        %512 = vst.msk [vmem:[%s286 + $0x8] sm:$0xff] %vm510, %v406
        %513 = vst.msk [vmem:[%s286 + $0x10] sm:$0xff] %vm510, %v412
        %514 = vst.msk [vmem:[%s286 + $0x18] sm:$0xff] %vm510, %v418
        %515 = vst.msk [vmem:[%s286 + $0x20] sm:$0xff] %vm510, %v427
        %516 = vst.msk [vmem:[%s286 + $0x28] sm:$0xff] %vm510, %v429
        %517 = vst.msk [vmem:[%s286 + $0x30] sm:$0xff] %vm510, %v431
        %518 = vst.msk [vmem:[%s286 + $0x38] sm:$0xff] %vm510, %v433
        %519 = vst.msk [vmem:[%s286 + $0x40] sm:$0xff] %vm510, %v439
        %520 = vst.msk [vmem:[%s286 + $0x48] sm:$0xff] %vm510, %v441
        %521 = vst.msk [vmem:[%s286 + $0x50] sm:$0xff] %vm510, %v443
        %522 = vst.msk [vmem:[%s286 + $0x58] sm:$0xff] %vm510, %v445
        %523 = vst.msk [vmem:[%s286 + $0x60] sm:$0xff] %vm510, %v451
        %524 = vst.msk [vmem:[%s286 + $0x68] sm:$0xff] %vm510, %v453
        %525 = vst.msk [vmem:[%s286 + $0x70] sm:$0xff] %vm510, %v455
        %526 = vst.msk [vmem:[%s286 + $0x78] sm:$0xff] %vm510, %v457
        %527 = vst.msk [vmem:[%s286 + $0x80] sm:$0xff] %vm510, %v463
        %528 = vst.msk [vmem:[%s286 + $0x88] sm:$0xff] %vm510, %v465
        %529 = vst.msk [vmem:[%s286 + $0x90] sm:$0xff] %vm510, %v467
        %530 = vst.msk [vmem:[%s286 + $0x98] sm:$0xff] %vm510, %v469
        %531 = vst.msk [vmem:[%s286 + $0xa0] sm:$0xff] %vm510, %v475
        %532 = vst.msk [vmem:[%s286 + $0xa8] sm:$0xff] %vm510, %v477
        %533 = vst.msk [vmem:[%s286 + $0xb0] sm:$0xff] %vm510, %v479
        %534 = vst.msk [vmem:[%s286 + $0xb8] sm:$0xff] %vm510, %v481
        %535 = vst.msk [vmem:[%s286 + $0xc0] sm:$0xff] %vm510, %v487
        %536 = vst.msk [vmem:[%s286 + $0xc8] sm:$0xff] %vm510, %v489
        %537 = vst.msk [vmem:[%s286 + $0xd0] sm:$0xff] %vm510, %v491
        %538 = vst.msk [vmem:[%s286 + $0xd8] sm:$0xff] %vm510, %v493
        %539 = vst.msk [vmem:[%s286 + $0xe0] sm:$0xff] %vm510, %v499
        %540 = vst.msk [vmem:[%s286 + $0xe8] sm:$0xff] %vm510, %v501
        %541 = vst.msk [vmem:[%s286 + $0xf0] sm:$0xff] %vm510, %v503
        %542 = vst.msk [vmem:[%s286 + $0xf8] sm:$0xff] %vm510, %v505
        %543 = vrot.lane.b32.xlu0 %v400, 64
        %v544 = vpop.permute.xlu0 %543
        %545 = vrot.lane.b32.xlu0 %v406, 64
        %v546 = vpop.permute.xlu0 %545
        %547 = vrot.lane.b32.xlu0 %v412, 64
        %v548 = vpop.permute.xlu0 %547
        %549 = vrot.lane.b32.xlu0 %v418, 64
        %v550 = vpop.permute.xlu0 %549
        %551 = vrot.lane.b32.xlu0 %v427, 64
        %v552 = vpop.permute.xlu0 %551
        %553 = vrot.lane.b32.xlu0 %v429, 64
        %v554 = vpop.permute.xlu0 %553
        %555 = vrot.lane.b32.xlu0 %v431, 64
        %v556 = vpop.permute.xlu0 %555
        %557 = vrot.lane.b32.xlu0 %v433, 64
        %v558 = vpop.permute.xlu0 %557
        %559 = vrot.lane.b32.xlu0 %v439, 64
        %v560 = vpop.permute.xlu0 %559
        %561 = vrot.lane.b32.xlu0 %v441, 64
        %v562 = vpop.permute.xlu0 %561
        %563 = vrot.lane.b32.xlu0 %v443, 64
        %v564 = vpop.permute.xlu0 %563
        %565 = vrot.lane.b32.xlu0 %v445, 64
        %v566 = vpop.permute.xlu0 %565
        %567 = vrot.lane.b32.xlu0 %v451, 64
        %v568 = vpop.permute.xlu0 %567
        %569 = vrot.lane.b32.xlu0 %v453, 64
        %v570 = vpop.permute.xlu0 %569
        %571 = vrot.lane.b32.xlu0 %v455, 64
        %v572 = vpop.permute.xlu0 %571
        %573 = vrot.lane.b32.xlu0 %v457, 64
        %v574 = vpop.permute.xlu0 %573
        %575 = vrot.lane.b32.xlu0 %v463, 64
        %v576 = vpop.permute.xlu0 %575
        %577 = vrot.lane.b32.xlu0 %v465, 64
        %v578 = vpop.permute.xlu0 %577
        %579 = vrot.lane.b32.xlu0 %v467, 64
        %v580 = vpop.permute.xlu0 %579
        %581 = vrot.lane.b32.xlu0 %v469, 64
        %v582 = vpop.permute.xlu0 %581
        %583 = vrot.lane.b32.xlu0 %v475, 64
        %v584 = vpop.permute.xlu0 %583
        %585 = vrot.lane.b32.xlu0 %v477, 64
        %v586 = vpop.permute.xlu0 %585
        %587 = vrot.lane.b32.xlu0 %v479, 64
        %v588 = vpop.permute.xlu0 %587
        %589 = vrot.lane.b32.xlu0 %v481, 64
        %v590 = vpop.permute.xlu0 %589
        %591 = vrot.lane.b32.xlu0 %v487, 64
        %v592 = vpop.permute.xlu0 %591
        %593 = vrot.lane.b32.xlu0 %v489, 64
        %v594 = vpop.permute.xlu0 %593
        %595 = vrot.lane.b32.xlu0 %v491, 64
        %v596 = vpop.permute.xlu0 %595
        %597 = vrot.lane.b32.xlu0 %v493, 64
        %v598 = vpop.permute.xlu0 %597
        %599 = vrot.lane.b32.xlu0 %v499, 64
        %v600 = vpop.permute.xlu0 %599
        %601 = vrot.lane.b32.xlu0 %v501, 64
        %v602 = vpop.permute.xlu0 %601
        %603 = vrot.lane.b32.xlu0 %v503, 64
        %v604 = vpop.permute.xlu0 %603
        %605 = vrot.lane.b32.xlu0 %v505, 64
        %v606 = vpop.permute.xlu0 %605
        %639 = vst.msk [vmem:[%s296] sm:$0xff] %vm510, %v544
        %640 = vst.msk [vmem:[%s296 + $0x8] sm:$0xff] %vm510, %v546
        %641 = vst.msk [vmem:[%s296 + $0x10] sm:$0xff] %vm510, %v548
        %642 = vst.msk [vmem:[%s296 + $0x18] sm:$0xff] %vm510, %v550
        %643 = vst.msk [vmem:[%s296 + $0x20] sm:$0xff] %vm510, %v552
        %644 = vst.msk [vmem:[%s296 + $0x28] sm:$0xff] %vm510, %v554
        %645 = vst.msk [vmem:[%s296 + $0x30] sm:$0xff] %vm510, %v556
        %646 = vst.msk [vmem:[%s296 + $0x38] sm:$0xff] %vm510, %v558
        %647 = vst.msk [vmem:[%s296 + $0x40] sm:$0xff] %vm510, %v560
        %648 = vst.msk [vmem:[%s296 + $0x48] sm:$0xff] %vm510, %v562
        %649 = vst.msk [vmem:[%s296 + $0x50] sm:$0xff] %vm510, %v564
        %650 = vst.msk [vmem:[%s296 + $0x58] sm:$0xff] %vm510, %v566
        %651 = vst.msk [vmem:[%s296 + $0x60] sm:$0xff] %vm510, %v568
        %652 = vst.msk [vmem:[%s296 + $0x68] sm:$0xff] %vm510, %v570
        %653 = vst.msk [vmem:[%s296 + $0x70] sm:$0xff] %vm510, %v572
        %654 = vst.msk [vmem:[%s296 + $0x78] sm:$0xff] %vm510, %v574
        %655 = vst.msk [vmem:[%s296 + $0x80] sm:$0xff] %vm510, %v576
        %656 = vst.msk [vmem:[%s296 + $0x88] sm:$0xff] %vm510, %v578
        %657 = vst.msk [vmem:[%s296 + $0x90] sm:$0xff] %vm510, %v580
        %658 = vst.msk [vmem:[%s296 + $0x98] sm:$0xff] %vm510, %v582
        %659 = vst.msk [vmem:[%s296 + $0xa0] sm:$0xff] %vm510, %v584
        %660 = vst.msk [vmem:[%s296 + $0xa8] sm:$0xff] %vm510, %v586
        %661 = vst.msk [vmem:[%s296 + $0xb0] sm:$0xff] %vm510, %v588
        %662 = vst.msk [vmem:[%s296 + $0xb8] sm:$0xff] %vm510, %v590
        %663 = vst.msk [vmem:[%s296 + $0xc0] sm:$0xff] %vm510, %v592
        %664 = vst.msk [vmem:[%s296 + $0xc8] sm:$0xff] %vm510, %v594
        %665 = vst.msk [vmem:[%s296 + $0xd0] sm:$0xff] %vm510, %v596
        %666 = vst.msk [vmem:[%s296 + $0xd8] sm:$0xff] %vm510, %v598
        %667 = vst.msk [vmem:[%s296 + $0xe0] sm:$0xff] %vm510, %v600
        %668 = vst.msk [vmem:[%s296 + $0xe8] sm:$0xff] %vm510, %v602
        %669 = vst.msk [vmem:[%s296 + $0xf0] sm:$0xff] %vm510, %v604
        %670 = vst.msk [vmem:[%s296 + $0xf8] sm:$0xff] %vm510, %v606
        %675 = vrot.lane.b32.xlu0 %v402, 120
        %v676 = vpop.permute.xlu0 %675
        %677 = vrot.lane.b32.xlu0 %v408, 120
        %v678 = vpop.permute.xlu0 %677
        %679 = vrot.lane.b32.xlu0 %v414, 120
        %v680 = vpop.permute.xlu0 %679
        %681 = vrot.lane.b32.xlu0 %v420, 120
        %v682 = vpop.permute.xlu0 %681
        %687 = vrot.lane.b32.xlu0 %v402, 112
        %v688 = vpop.permute.xlu0 %687
        %689 = vrot.lane.b32.xlu0 %v408, 112
        %v690 = vpop.permute.xlu0 %689
        %691 = vrot.lane.b32.xlu0 %v414, 112
        %v692 = vpop.permute.xlu0 %691
        %693 = vrot.lane.b32.xlu0 %v420, 112
        %v694 = vpop.permute.xlu0 %693
        %699 = vrot.lane.b32.xlu0 %v402, 104
        %v700 = vpop.permute.xlu0 %699
        %701 = vrot.lane.b32.xlu0 %v408, 104
        %v702 = vpop.permute.xlu0 %701
        %703 = vrot.lane.b32.xlu0 %v414, 104
        %v704 = vpop.permute.xlu0 %703
        %705 = vrot.lane.b32.xlu0 %v420, 104
        %v706 = vpop.permute.xlu0 %705
        %711 = vrot.lane.b32.xlu0 %v402, 96
        %v712 = vpop.permute.xlu0 %711
        %713 = vrot.lane.b32.xlu0 %v408, 96
        %v714 = vpop.permute.xlu0 %713
        %715 = vrot.lane.b32.xlu0 %v414, 96
        %v716 = vpop.permute.xlu0 %715
        %717 = vrot.lane.b32.xlu0 %v420, 96
        %v718 = vpop.permute.xlu0 %717
        %723 = vrot.lane.b32.xlu0 %v402, 88
        %v724 = vpop.permute.xlu0 %723
        %725 = vrot.lane.b32.xlu0 %v408, 88
        %v726 = vpop.permute.xlu0 %725
        %727 = vrot.lane.b32.xlu0 %v414, 88
        %v728 = vpop.permute.xlu0 %727
        %729 = vrot.lane.b32.xlu0 %v420, 88
        %v730 = vpop.permute.xlu0 %729
        %735 = vrot.lane.b32.xlu0 %v402, 80
        %v736 = vpop.permute.xlu0 %735
        %737 = vrot.lane.b32.xlu0 %v408, 80
        %v738 = vpop.permute.xlu0 %737
        %739 = vrot.lane.b32.xlu0 %v414, 80
        %v740 = vpop.permute.xlu0 %739
        %741 = vrot.lane.b32.xlu0 %v420, 80
        %v742 = vpop.permute.xlu0 %741
        %747 = vrot.lane.b32.xlu0 %v402, 72
        %v748 = vpop.permute.xlu0 %747
        %749 = vrot.lane.b32.xlu0 %v408, 72
        %v750 = vpop.permute.xlu0 %749
        %751 = vrot.lane.b32.xlu0 %v414, 72
        %v752 = vpop.permute.xlu0 %751
        %753 = vrot.lane.b32.xlu0 %v420, 72
        %v754 = vpop.permute.xlu0 %753
        %759 = vst.msk [vmem:[%s306] sm:$0xff] %vm510, %v402
        %760 = vst.msk [vmem:[%s306 + $0x8] sm:$0xff] %vm510, %v408
        %761 = vst.msk [vmem:[%s306 + $0x10] sm:$0xff] %vm510, %v414
        %762 = vst.msk [vmem:[%s306 + $0x18] sm:$0xff] %vm510, %v420
        %763 = vst.msk [vmem:[%s306 + $0x20] sm:$0xff] %vm510, %v676
        %764 = vst.msk [vmem:[%s306 + $0x28] sm:$0xff] %vm510, %v678
        %765 = vst.msk [vmem:[%s306 + $0x30] sm:$0xff] %vm510, %v680
        %766 = vst.msk [vmem:[%s306 + $0x38] sm:$0xff] %vm510, %v682
        %767 = vst.msk [vmem:[%s306 + $0x40] sm:$0xff] %vm510, %v688
        %768 = vst.msk [vmem:[%s306 + $0x48] sm:$0xff] %vm510, %v690
        %769 = vst.msk [vmem:[%s306 + $0x50] sm:$0xff] %vm510, %v692
        %770 = vst.msk [vmem:[%s306 + $0x58] sm:$0xff] %vm510, %v694
        %771 = vst.msk [vmem:[%s306 + $0x60] sm:$0xff] %vm510, %v700
        %772 = vst.msk [vmem:[%s306 + $0x68] sm:$0xff] %vm510, %v702
        %773 = vst.msk [vmem:[%s306 + $0x70] sm:$0xff] %vm510, %v704
        %774 = vst.msk [vmem:[%s306 + $0x78] sm:$0xff] %vm510, %v706
        %775 = vst.msk [vmem:[%s306 + $0x80] sm:$0xff] %vm510, %v712
        %776 = vst.msk [vmem:[%s306 + $0x88] sm:$0xff] %vm510, %v714
        %777 = vst.msk [vmem:[%s306 + $0x90] sm:$0xff] %vm510, %v716
        %778 = vst.msk [vmem:[%s306 + $0x98] sm:$0xff] %vm510, %v718
        %779 = vst.msk [vmem:[%s306 + $0xa0] sm:$0xff] %vm510, %v724
        %780 = vst.msk [vmem:[%s306 + $0xa8] sm:$0xff] %vm510, %v726
        %781 = vst.msk [vmem:[%s306 + $0xb0] sm:$0xff] %vm510, %v728
        %782 = vst.msk [vmem:[%s306 + $0xb8] sm:$0xff] %vm510, %v730
        %783 = vst.msk [vmem:[%s306 + $0xc0] sm:$0xff] %vm510, %v736
        %784 = vst.msk [vmem:[%s306 + $0xc8] sm:$0xff] %vm510, %v738
        %785 = vst.msk [vmem:[%s306 + $0xd0] sm:$0xff] %vm510, %v740
        %786 = vst.msk [vmem:[%s306 + $0xd8] sm:$0xff] %vm510, %v742
        %787 = vst.msk [vmem:[%s306 + $0xe0] sm:$0xff] %vm510, %v748
        %788 = vst.msk [vmem:[%s306 + $0xe8] sm:$0xff] %vm510, %v750
        %789 = vst.msk [vmem:[%s306 + $0xf0] sm:$0xff] %vm510, %v752
        %790 = vst.msk [vmem:[%s306 + $0xf8] sm:$0xff] %vm510, %v754
        %s791 = smul.u32 4, %s25
        %p792 = scmp.lt.s32.totalorder %s24, 1
        %s793 = scalar_select %p792, %s24, 1
        %p794 = scmp.lt.s32.totalorder %s791, 3
        %s795 = scalar_select %p794, %s791, 3
        %s796 = smul.addr %s793, 32
        %s797 = sadd.s32 %s795, %s796
        %s798 = smul.addr %s797, 8
        %s799 = scalar_lea.vmem %s2, %s798
        %s800 = smul.u32 4, %s25
        %p801 = scmp.lt.s32.totalorder %s24, 1
        %s802 = scalar_select %p801, %s24, 1
        %p803 = scmp.lt.s32.totalorder %s800, 3
        %s804 = scalar_select %p803, %s800, 3
        %s805 = smul.addr %s802, 32
        %s806 = sadd.s32 %s804, %s805
        %s807 = smul.addr %s806, 8
        %s808 = scalar_lea.vmem %s3, %s807
        %s809 = smul.u32 4, %s25
        %p810 = scmp.lt.s32.totalorder %s24, 1
        %s811 = scalar_select %p810, %s24, 1
        %p812 = scmp.lt.s32.totalorder %s809, 3
        %s813 = scalar_select %p812, %s809, 3
        %s814 = smul.addr %s811, 32
        %s815 = sadd.s32 %s813, %s814
        %s816 = smul.addr %s815, 8
        %s817 = scalar_lea.vmem %s4, %s816
        // Predicated region
        $region37: #{tpu_custom_call.1} parent=27 // pred_check
          %p818 = pneg %p101
        $region38: #{tpu_custom_call.1} parent=27 // pred_check_branch
          %820 = sbr.rel (%p818) target = $region40
        $region39: #{tpu_custom_call.1} parent=27 // pred_region
          %s821 = smul.u32 4, %s25
        $region40: #{tpu_custom_call.1} parent=27 // pred_fallthru
          _
        // Predicated region
        $region41: #{tpu_custom_call.1} parent=27 // pred_check
          %p822 = pneg %p129
        $region42: #{tpu_custom_call.1} parent=27 // pred_check_branch
          %824 = sbr.rel (%p822) target = $region44
        $region43: #{tpu_custom_call.1} parent=27 // pred_region
          %s825 = smul.u32 4, %s25
        $region44: #{tpu_custom_call.1} parent=27 // pred_fallthru
          _
        // Predicated region
        $region45: #{tpu_custom_call.1} parent=27 // pred_check
          %p826 = pneg %p157
        $region46: #{tpu_custom_call.1} parent=27 // pred_check_branch
          %828 = sbr.rel (%p826) target = $region48
        $region47: #{tpu_custom_call.1} parent=27 // pred_region
          %s829 = smul.u32 4, %s25
        $region48: #{tpu_custom_call.1} parent=27 // pred_fallthru
          _
      $region28: #{tpu_custom_call.1} parent=5 // pred_fallthru
        _
      %p830 = scmp.le.s32.totalorder 2, %s15
      // Predicated region
      $region49: #{tpu_custom_call.1} parent=5 // pred_check
        %p831 = pneg %p830
      $region50: #{tpu_custom_call.1} parent=5 // pred_check_branch
        %833 = sbr.rel (%p831) target = $region52
      $region51: #{tpu_custom_call.1} parent=5 // pred_region
        %s834 = ssub.s32 %s15, 2
        // Predicated region
        $region53: #{tpu_custom_call.1} parent=51 // pred_check
          %p835 = pneg %p107
        $region54: #{tpu_custom_call.1} parent=51 // pred_check_branch
          %837 = sbr.rel (%p835) target = $region56
        $region55: #{tpu_custom_call.1} parent=51 // pred_region
          %s838 = smul.u32 4, %s27
          %p839 = scmp.lt.s32.totalorder %s26, 1
          %s840 = scalar_select %p839, %s26, 1
          %p841 = scmp.lt.s32.totalorder %s838, 3
          %s842 = scalar_select %p841, %s838, 3
          %s843 = smul.addr %s840, 32
          %s844 = sadd.s32 %s842, %s843
          %s845 = smul.addr %s844, 8
          %s846 = scalar_lea.vmem %s2, %s845
        $region56: #{tpu_custom_call.1} parent=51 // pred_fallthru
          _
        // Predicated region
        $region57: #{tpu_custom_call.1} parent=51 // pred_check
          %p847 = pneg %p135
        $region58: #{tpu_custom_call.1} parent=51 // pred_check_branch
          %849 = sbr.rel (%p847) target = $region60
        $region59: #{tpu_custom_call.1} parent=51 // pred_region
          %s850 = smul.u32 4, %s27
          %p851 = scmp.lt.s32.totalorder %s26, 1
          %s852 = scalar_select %p851, %s26, 1
          %p853 = scmp.lt.s32.totalorder %s850, 3
          %s854 = scalar_select %p853, %s850, 3
          %s855 = smul.addr %s852, 32
          %s856 = sadd.s32 %s854, %s855
          %s857 = smul.addr %s856, 8
          %s858 = scalar_lea.vmem %s3, %s857
        $region60: #{tpu_custom_call.1} parent=51 // pred_fallthru
          _
        // Predicated region
        $region61: #{tpu_custom_call.1} parent=51 // pred_check
          %p859 = pneg %p163
        $region62: #{tpu_custom_call.1} parent=51 // pred_check_branch
          %861 = sbr.rel (%p859) target = $region64
        $region63: #{tpu_custom_call.1} parent=51 // pred_region
          %s862 = smul.u32 4, %s27
          %p863 = scmp.lt.s32.totalorder %s26, 1
          %s864 = scalar_select %p863, %s26, 1
          %p865 = scmp.lt.s32.totalorder %s862, 3
          %s866 = scalar_select %p865, %s862, 3
          %s867 = smul.addr %s864, 32
          %s868 = sadd.s32 %s866, %s867
          %s869 = smul.addr %s868, 8
          %s870 = scalar_lea.vmem %s4, %s869
        $region64: #{tpu_custom_call.1} parent=51 // pred_fallthru
          _
      $region52: #{tpu_custom_call.1} parent=5 // pred_fallthru
        _
    $region6: #{tpu_custom_call.1} parent=1 // loop_footer
      %s19 = sadd.s32 1, %s15
    $region7: #{tpu_custom_call.1} parent=1 // loop_footer_branch
      %14 = sbr.rel target = $region3
    $region8: #{tpu_custom_call.1} parent=1 // loop_exit
      _
    %871 = vsyncpa [#allocation3], 1
    %s872 = scalar_lea.sflag [#allocation3], 1
    %873 = vsyncpa %s872, 1
    %874 = vsyncpa [#allocation5], 1

</llo_original>
